<compile_context>
chip_gen: v5e
topology: v5e:2x2
jax: 0.10.0
libtpu: 0.0.40
codegen_flags: <defaults>
</compile_context>

<pallas_src>
import functools

import jax
import jax.numpy as jnp
from jax import lax
from jax.experimental import pallas as pl
from jax.experimental.pallas import tpu as pltpu


def _round_up(n, m):
    return ((n + m - 1) // m) * m


def _sublane_multiple(dtype):
    # f32 -> 8 rows / vreg, bf16/f16 -> 16, int8/fp8 -> 32.
    return max(8, 32 // jnp.dtype(dtype).itemsize)


def _vmem_budget_bytes():
    """~75% of physical VMEM per TensorCore (48 MiB v7x, 96 MiB v5e/v6e)."""
    try:
        cap = getattr(pltpu.get_tpu_info(), "vmem_capacity_bytes", None)
        if cap:
            return int(cap) * 3 // 4
    except Exception:
        pass
    return 48 * 1024 * 1024  # conservative: safe on every generation


def _choose_tiles(T, F, e_pad, x_item, w_item, out_item, budget, sub, t_cap):
    """Largest sublane-aligned token tile (and K tile if F is huge) that fits."""

    def fits(tt, tk, kb):
        nb_w = 1 if kb == 1 else 2
        need = (2 * tt * tk * x_item          # x, double-buffered
                + nb_w * 16 * tk * w_item     # W_red
                + 2 * e_pad * 16 * 4          # wg_n (pessimistic: 2 buffers)
                + 2 * tt * e_pad * out_item   # output, double-buffered
                + tt * 16 * 4)                # xr accumulator scratch
        return need <= budget

    t_hi = _round_up(min(max(T, sub), t_cap), sub)

    # Preferred: whole feature dim in one block (single K step).
    for tt in range(t_hi, 0, -sub):
        if fits(tt, F, 1):
            if tt >= min(256, t_hi):
                return tt, F, 1
            break  # fits only with a tiny token tile -> block K instead

    # F too wide for a decent token tile: block the feature (K) axis too.
    tt = min(t_hi, _round_up(512, sub))
    tk = 128
    for cand in range(_round_up(F, 128), 127, -128):
        if fits(tt, cand, 2):
            tk = cand
            break
    kb = -(-F // tk)
    if kb == 1:
        tk = F
    return tt, tk, kb


def moe_gate_kernel(x_ref, wred_ref, wgn_ref, out_ref, xr_acc, *, f_total, tile_k):
    # x_ref:    [TILE_T, TILE_K]  streamed token tile (native / bf16 dtype)
    # wred_ref: [16, TILE_K]      reduction weight, torch layout (lane-dense)
    # wgn_ref:  [E_pad, 16]       pre-normalized gate weights (f32, resident)
    # out_ref:  [TILE_T, E_pad]   logits tile
    # xr_acc:   [TILE_T, 16] f32  reduced-feature accumulator over K blocks
    k = pl.program_id(1)
    nk = pl.num_programs(1)

    @pl.when(k == 0)
    def _():
        xr_acc[...] = jnp.zeros_like(xr_acc)

    x = x_ref[...]
    wred = wred_ref[...]
    if f_total % tile_k != 0:
        # Ragged last K block: zero the out-of-bounds feature columns
        # (select, not multiply, so garbage/NaN padding cannot leak through).
        valid = f_total - k * tile_k
        xcol = lax.broadcasted_iota(jnp.int32, x.shape, 1)
        x = jnp.where(xcol < valid, x, jnp.zeros_like(x))
        wcol = lax.broadcasted_iota(jnp.int32, wred.shape, 1)
        wred = jnp.where(wcol < valid, wred, jnp.zeros_like(wred))

    # xr += x @ W_red.T : contract feature dims, both operands lane-dense,
    # f32 accumulation on the MXU.
    xr_acc[...] += lax.dot_general(
        x, wred, (((1,), (1,)), ((), ())),
        preferred_element_type=jnp.float32)                      # [TILE_T, 16]

    @pl.when(k == nk - 1)
    def _():
        # logits = xr @ wg_n.T : contract dim 1 with dim 1.
        logits = lax.dot_general(
            xr_acc[...], wgn_ref[...], (((1,), (1,)), ((), ())),
            preferred_element_type=jnp.float32)               # [TILE_T, E_pad]
        out_ref[...] = logits.astype(out_ref.dtype)


def moe_gate(x, w_reduction, wg, *, tile_t=None, stream_in_bf16=False):
    """x: [T, F]; w_reduction: [16, F] (torch Linear layout); wg: [E, 16]."""
    T, F = x.shape
    E, H = wg.shape
    assert w_reduction.shape == (H, F)
    out_dtype = x.dtype

    # --- hoisted wg renorm (mirrors torch exactly: rescale then F.normalize) ---
    wg_norm = jnp.sqrt(jnp.sum(wg * wg, axis=1, keepdims=True))
    wg_scaled = (wg * (1.5 / wg_norm)).astype(jnp.float32)
    n = jnp.sqrt(jnp.sum(wg_scaled * wg_scaled, axis=1, keepdims=True))
    wg_n = wg_scaled / jnp.maximum(n, 1e-4)
    # TODO(synk): the torch module also mutates the `wg` parameter in-place
    # (persistent side effect); logits are identical but the rescaled
    # parameter is not emitted here.

    # --- optional bf16 streaming of the HBM-dominant operands ---
    if stream_in_bf16 and x.dtype == jnp.float32:
        x_in = x.astype(jnp.bfloat16)
        w_in = w_reduction.astype(jnp.bfloat16)
    else:
        x_in, w_in = x, w_reduction

    # --- expert padding: lane-dense stores only when the x stream dominates ---
    if E % 128 == 0:
        e_pad = E
    elif F >= 512:
        e_pad = _round_up(E, 128)   # unmasked 128-lane stores, <2% extra traffic
    else:
        e_pad = E                   # small F: avoid 128/E write amplification
    if e_pad != E:
        wg_n = jnp.concatenate(
            [wg_n, jnp.zeros((e_pad - E, H), jnp.float32)], axis=0)

    # --- generation-aware adaptive tiling ---
    budget = _vmem_budget_bytes()
    sub = _sublane_multiple(x_in.dtype)
    t_cap = _round_up(tile_t, sub) if tile_t else 1024
    tile_t_sel, tile_k, n_k = _choose_tiles(
        T, F, e_pad,
        jnp.dtype(x_in.dtype).itemsize, jnp.dtype(w_in.dtype).itemsize,
        jnp.dtype(out_dtype).itemsize, budget, sub, t_cap)
    n_t = pl.cdiv(T, tile_t_sel)    # partial last token tile handled by Pallas

    kernel = functools.partial(moe_gate_kernel, f_total=F, tile_k=tile_k)

    def _run(single_buffer_weights):
        def resident(shape):
            if single_buffer_weights:
                return pl.BlockSpec(shape, lambda i, k: (0, 0),
                                    pipeline_mode=pl.Buffered(1))
            return pl.BlockSpec(shape, lambda i, k: (0, 0))

        if n_k == 1:
            wred_spec = resident((H, tile_k))                 # VMEM-resident
        else:
            wred_spec = pl.BlockSpec((H, tile_k), lambda i, k: (0, k))
        wgn_spec = resident((e_pad, H))                       # VMEM-resident

        return pl.pallas_call(
            kernel,
            out_shape=jax.ShapeDtypeStruct((T, e_pad), out_dtype),
            grid=(n_t, n_k),
            in_specs=[
                pl.BlockSpec((tile_t_sel, tile_k), lambda i, k: (i, k)),
                wred_spec,
                wgn_spec,
            ],
            out_specs=pl.BlockSpec((tile_t_sel, e_pad), lambda i, k: (i, 0)),
            scratch_shapes=[pltpu.VMEM((tile_t_sel, 16), jnp.float32)],
            compiler_params=pltpu.CompilerParams(
                dimension_semantics=("parallel", "arbitrary"),
                vmem_limit_bytes=budget,
            ),
        )(x_in, w_in, wg_n)

    if hasattr(pl, "Buffered"):
        try:
            out = _run(True)
        except Exception:
            out = _run(False)   # installed Pallas rejects single-buffering
    else:
        out = _run(False)

    if e_pad != E:
        out = out[:, :E]        # pad columns are exact zeros; cheap vs x stream
    return out


def _orthogonal_init(key, shape, gain):
    """Deterministic stand-in for torch.nn.init.orthogonal_ (rows orthonormal)."""
    rows, cols = shape
    a = jax.random.normal(key, (max(rows, cols), min(rows, cols)), jnp.float32)
    q, r = jnp.linalg.qr(a)
    q = q * jnp.sign(jnp.diag(r))
    if rows < cols:
        q = q.T
    return gain * q[:rows, :cols]


def moe_gate_ref(x, w_reduction, wg):
    """Pure-JAX reference mirroring the PyTorch forward exactly (two-step norm)."""
    xr = x @ w_reduction.T
    wg_norm = jnp.linalg.norm(wg, axis=1, keepdims=True)
    wg_s = wg * (1.5 / wg_norm)
    n = jnp.linalg.norm(wg_s, axis=1, keepdims=True)
    wg_n = wg_s / jnp.maximum(n, 1e-4)
    return (xr @ wg_n.T).astype(x.dtype)


if __name__ == "__main__":
    num_experts = 8
    in_features = 32
    batch, seq = 2, 8
    T = batch * seq  # MoEGate._cosine requires a 2D [tokens, features] input

    key = jax.random.PRNGKey(0)
    kx, kw, kg = jax.random.split(key, 3)

    x = jax.random.normal(kx, (T, in_features), jnp.float32)
    # nn.Linear(in_features, 16, bias=False).weight -> [16, in_features]
    w_reduction = jax.random.normal(kw, (16, in_features), jnp.float32) * 0.1
    # wg: [num_experts, 16], orthogonal init with gain 0.32
    wg = _orthogonal_init(kg, (num_experts, 16), gain=0.32)

    logits = moe_gate(x, w_reduction, wg)
    logits = jax.block_until_ready(logits)

    ref = moe_gate_ref(x, w_reduction, wg)
    assert logits.shape == (T, num_experts)
    assert jnp.allclose(logits, ref, atol=2e-5, rtol=2e-5), float(
        jnp.max(jnp.abs(logits - ref)))

    print("KERNEL_OK")
</pallas_src>

<mosaic_0001>
module attributes {stable_mosaic.version = 11 : i64} {
  func.func @moe_gate_kernel(%arg0: i32, %arg1: i32, %arg2: memref<16x32xf32, #tpu.memory_space<vmem>>, %arg3: memref<16x32xf32, #tpu.memory_space<vmem>>, %arg4: memref<8x16xf32, #tpu.memory_space<vmem>>, %arg5: memref<16x8xf32, #tpu.memory_space<vmem>>, %arg6: memref<16x16xf32, #tpu.memory_space<vmem>>) attributes {dimension_semantics = [#tpu.dimension_semantics<parallel>, #tpu.dimension_semantics<arbitrary>], iteration_bounds = array<i64: 1, 1>, scalar_prefetch = 0 : i64, scratch_operands = 1 : i64, tpu.core_type = #tpu.core_type<tc>, window_params = [{transform_indices = @transform_0, window_bounds = array<i64: 16, 32>}, {pipeline_mode = #tpu.pipeline_mode<synchronous>, transform_indices = @transform_1, window_bounds = array<i64: 16, 32>}, {pipeline_mode = #tpu.pipeline_mode<synchronous>, transform_indices = @transform_2, window_bounds = array<i64: 8, 16>}, {transform_indices = @transform_3, window_bounds = array<i64: 16, 8>}]} {
    %c0_i32 = arith.constant 0 : i32
    %0 = arith.cmpi eq, %arg1, %c0_i32 : i32
    %1 = arith.extui %0 : i1 to i32
    %c0_i32_0 = arith.constant 0 : i32
    %2 = arith.cmpi ne, %1, %c0_i32_0 : i32
    scf.if %2 {
      %cst_10 = arith.constant 0.000000e+00 : f32
      %12 = vector.broadcast %cst_10 : f32 to vector<16x16xf32>
      %c0_11 = arith.constant 0 : index
      %c0_12 = arith.constant 0 : index
      %13 = vector.load %arg6[%c0_11, %c0_12] : memref<16x16xf32, #tpu.memory_space<vmem>>, vector<16x16xf32>
      tpu.vector_store %arg6[%c0_11, %c0_12], %12 {strides = array<i32>} : memref<16x16xf32, #tpu.memory_space<vmem>>, vector<16x16xf32>,
    } else {
    }
    %c0 = arith.constant 0 : index
    %c0_1 = arith.constant 0 : index
    %3 = vector.load %arg2[%c0, %c0_1] : memref<16x32xf32, #tpu.memory_space<vmem>>, vector<16x32xf32>
    %c0_2 = arith.constant 0 : index
    %c0_3 = arith.constant 0 : index
    %4 = vector.load %arg3[%c0_2, %c0_3] : memref<16x32xf32, #tpu.memory_space<vmem>>, vector<16x32xf32>
    %c0_4 = arith.constant 0 : index
    %c0_5 = arith.constant 0 : index
    %5 = vector.load %arg6[%c0_4, %c0_5] : memref<16x16xf32, #tpu.memory_space<vmem>>, vector<16x16xf32>
    %cst = arith.constant dense<0.000000e+00> : vector<16x16xf32>
    %6 = tpu.matmul %3, %4, %cst {dimension_numbers = #tpu.dot_dimension_numbers<[1], [1], [0], [0], [0, 0, 1, 0], [], []>} : vector<16x32xf32>, vector<16x32xf32>, vector<16x16xf32> -> vector<16x16xf32>
    %7 = arith.addf %5, %6 : vector<16x16xf32>
    %c0_6 = arith.constant 0 : index
    %c0_7 = arith.constant 0 : index
    %8 = vector.load %arg6[%c0_6, %c0_7] : memref<16x16xf32, #tpu.memory_space<vmem>>, vector<16x16xf32>
    tpu.vector_store %arg6[%c0_6, %c0_7], %7 {strides = array<i32>} : memref<16x16xf32, #tpu.memory_space<vmem>>, vector<16x16xf32>,
    %c0_i32_8 = arith.constant 0 : i32
    %9 = arith.cmpi eq, %arg1, %c0_i32_8 : i32
    %10 = arith.extui %9 : i1 to i32
    %c0_i32_9 = arith.constant 0 : i32
    %11 = arith.cmpi ne, %10, %c0_i32_9 : i32
    scf.if %11 {
      %c0_10 = arith.constant 0 : index
      %c0_11 = arith.constant 0 : index
      %12 = vector.load %arg6[%c0_10, %c0_11] : memref<16x16xf32, #tpu.memory_space<vmem>>, vector<16x16xf32>
      %c0_12 = arith.constant 0 : index
      %c0_13 = arith.constant 0 : index
      %13 = vector.load %arg4[%c0_12, %c0_13] : memref<8x16xf32, #tpu.memory_space<vmem>>, vector<8x16xf32>
      %cst_14 = arith.constant dense<0.000000e+00> : vector<16x8xf32>
      %14 = tpu.matmul %12, %13, %cst_14 {dimension_numbers = #tpu.dot_dimension_numbers<[1], [1], [0], [0], [0, 0, 1, 0], [], []>} : vector<16x16xf32>, vector<8x16xf32>, vector<16x8xf32> -> vector<16x8xf32>
      %c0_15 = arith.constant 0 : index
      %c0_16 = arith.constant 0 : index
      %15 = vector.load %arg5[%c0_15, %c0_16] : memref<16x8xf32, #tpu.memory_space<vmem>>, vector<16x8xf32>
      tpu.vector_store %arg5[%c0_15, %c0_16], %14 {strides = array<i32>} : memref<16x8xf32, #tpu.memory_space<vmem>>, vector<16x8xf32>,
    } else {
    }
    return
  }
  func.func @transform_0(%arg0: i32, %arg1: i32) -> (i32, i32) {
    %c0_i32 = arith.constant 0 : i32
    return %arg0, %arg1 : i32, i32
  }
  func.func @transform_1(%arg0: i32, %arg1: i32) -> (i32, i32) {
    %c0_i32 = arith.constant 0 : i32
    %c0_i32_0 = arith.constant 0 : i32
    %c0_i32_1 = arith.constant 0 : i32
    return %c0_i32, %c0_i32_0 : i32, i32
  }
  func.func @transform_2(%arg0: i32, %arg1: i32) -> (i32, i32) {
    %c0_i32 = arith.constant 0 : i32
    %c0_i32_0 = arith.constant 0 : i32
    %c0_i32_1 = arith.constant 0 : i32
    return %c0_i32, %c0_i32_0 : i32, i32
  }
  func.func @transform_3(%arg0: i32, %arg1: i32) -> (i32, i32) {
    %c0_i32 = arith.constant 0 : i32
    %c0_i32_0 = arith.constant 0 : i32
    return %arg0, %c0_i32 : i32, i32
  }
}

module attributes {stable_mosaic.version = 11 : i64} {
  func.func @moe_gate_kernel(%arg0: i32, %arg1: i32, %arg2: memref<16x32xf32, #tpu.memory_space<vmem>>, %arg3: memref<16x32xf32, #tpu.memory_space<vmem>>, %arg4: memref<8x16xf32, #tpu.memory_space<vmem>>, %arg5: memref<16x8xf32, #tpu.memory_space<vmem>>, %arg6: memref<16x16xf32, #tpu.memory_space<vmem>>) attributes {dimension_semantics = [#tpu.dimension_semantics<parallel>, #tpu.dimension_semantics<arbitrary>], iteration_bounds = array<i64: 1, 1>, scalar_prefetch = 0 : i64, scratch_operands = 1 : i64, tpu.core_type = #tpu.core_type<tc>, window_params = [{transform_indices = @transform_0, window_bounds = array<i64: 16, 32>}, {pipeline_mode = #tpu.pipeline_mode<synchronous>, transform_indices = @transform_1, window_bounds = array<i64: 16, 32>}, {pipeline_mode = #tpu.pipeline_mode<synchronous>, transform_indices = @transform_2, window_bounds = array<i64: 8, 16>}, {transform_indices = @transform_3, window_bounds = array<i64: 16, 8>}]} {
    %c0_i32 = arith.constant 0 : i32
    %0 = arith.cmpi eq, %arg1, %c0_i32 : i32
    %1 = arith.extui %0 : i1 to i32
    %c0_i32_0 = arith.constant 0 : i32
    %2 = arith.cmpi ne, %1, %c0_i32_0 : i32
    scf.if %2 {
      %cst_10 = arith.constant 0.000000e+00 : f32
      %12 = vector.broadcast %cst_10 : f32 to vector<16x16xf32>
      %c0_11 = arith.constant 0 : index
      %c0_12 = arith.constant 0 : index
      %13 = vector.load %arg6[%c0_11, %c0_12] : memref<16x16xf32, #tpu.memory_space<vmem>>, vector<16x16xf32>
      tpu.vector_store %arg6[%c0_11, %c0_12], %12 {strides = array<i32>} : memref<16x16xf32, #tpu.memory_space<vmem>>, vector<16x16xf32>,
    } else {
    }
    %c0 = arith.constant 0 : index
    %c0_1 = arith.constant 0 : index
    %3 = vector.load %arg2[%c0, %c0_1] : memref<16x32xf32, #tpu.memory_space<vmem>>, vector<16x32xf32>
    %c0_2 = arith.constant 0 : index
    %c0_3 = arith.constant 0 : index
    %4 = vector.load %arg3[%c0_2, %c0_3] : memref<16x32xf32, #tpu.memory_space<vmem>>, vector<16x32xf32>
    %c0_4 = arith.constant 0 : index
    %c0_5 = arith.constant 0 : index
    %5 = vector.load %arg6[%c0_4, %c0_5] : memref<16x16xf32, #tpu.memory_space<vmem>>, vector<16x16xf32>
    %cst = arith.constant dense<0.000000e+00> : vector<16x16xf32>
    %6 = tpu.matmul %3, %4, %cst {dimension_numbers = #tpu.dot_dimension_numbers<[1], [1], [0], [0], [0, 0, 1, 0], [], []>} : vector<16x32xf32>, vector<16x32xf32>, vector<16x16xf32> -> vector<16x16xf32>
    %7 = arith.addf %5, %6 : vector<16x16xf32>
    %c0_6 = arith.constant 0 : index
    %c0_7 = arith.constant 0 : index
    %8 = vector.load %arg6[%c0_6, %c0_7] : memref<16x16xf32, #tpu.memory_space<vmem>>, vector<16x16xf32>
    tpu.vector_store %arg6[%c0_6, %c0_7], %7 {strides = array<i32>} : memref<16x16xf32, #tpu.memory_space<vmem>>, vector<16x16xf32>,
    %c0_i32_8 = arith.constant 0 : i32
    %9 = arith.cmpi eq, %arg1, %c0_i32_8 : i32
    %10 = arith.extui %9 : i1 to i32
    %c0_i32_9 = arith.constant 0 : i32
    %11 = arith.cmpi ne, %10, %c0_i32_9 : i32
    scf.if %11 {
      %c0_10 = arith.constant 0 : index
      %c0_11 = arith.constant 0 : index
      %12 = vector.load %arg6[%c0_10, %c0_11] : memref<16x16xf32, #tpu.memory_space<vmem>>, vector<16x16xf32>
      %c0_12 = arith.constant 0 : index
      %c0_13 = arith.constant 0 : index
      %13 = vector.load %arg4[%c0_12, %c0_13] : memref<8x16xf32, #tpu.memory_space<vmem>>, vector<8x16xf32>
      %cst_14 = arith.constant dense<0.000000e+00> : vector<16x8xf32>
      %14 = tpu.matmul %12, %13, %cst_14 {dimension_numbers = #tpu.dot_dimension_numbers<[1], [1], [0], [0], [0, 0, 1, 0], [], []>} : vector<16x16xf32>, vector<8x16xf32>, vector<16x8xf32> -> vector<16x8xf32>
      %c0_15 = arith.constant 0 : index
      %c0_16 = arith.constant 0 : index
      %15 = vector.load %arg5[%c0_15, %c0_16] : memref<16x8xf32, #tpu.memory_space<vmem>>, vector<16x8xf32>
      tpu.vector_store %arg5[%c0_15, %c0_16], %14 {strides = array<i32>} : memref<16x8xf32, #tpu.memory_space<vmem>>, vector<16x8xf32>,
    } else {
    }
    return
  }
  func.func @transform_0(%arg0: i32, %arg1: i32) -> (i32, i32) {
    %c0_i32 = arith.constant 0 : i32
    return %arg0, %arg1 : i32, i32
  }
  func.func @transform_1(%arg0: i32, %arg1: i32) -> (i32, i32) {
    %c0_i32 = arith.constant 0 : i32
    %c0_i32_0 = arith.constant 0 : i32
    %c0_i32_1 = arith.constant 0 : i32
    return %c0_i32, %c0_i32_0 : i32, i32
  }
  func.func @transform_2(%arg0: i32, %arg1: i32) -> (i32, i32) {
    %c0_i32 = arith.constant 0 : i32
    %c0_i32_0 = arith.constant 0 : i32
    %c0_i32_1 = arith.constant 0 : i32
    return %c0_i32, %c0_i32_0 : i32, i32
  }
  func.func @transform_3(%arg0: i32, %arg1: i32) -> (i32, i32) {
    %c0_i32 = arith.constant 0 : i32
    %c0_i32_0 = arith.constant 0 : i32
    return %arg0, %c0_i32 : i32, i32
  }
}

</mosaic_0001>

<llo_original>
// kernel: tpu_custom_call.1
$region0: #{tpu_custom_call.1}
  #allocation0 [shape = 'u32[]', space=smem, size = 0x4, offset = 0x4, fixed_abs, tag = 'smem constant byte address 0x4 - core index']
  #allocation1 [shape = 'u32[72,128]{1,0:T(1,128)}', space=vmem, size = 0x9000, scoped, tag = 'internal scratch']
  #allocation2 [shape = 'f32[16,16]{1,0:T(8,128)}', space=vmem, size = 0x2000, scoped, tag = 'scratch operand']
  %s0 = inlined_call_operand.hbm [shape: f32[16,32], index: 0, kind: input, shape index: {}]
  %s1 = inlined_call_operand.hbm [shape: f32[16,32], index: 1, kind: input, shape index: {}]
  %s2 = inlined_call_operand.hbm [shape: f32[8,16], index: 2, kind: input, shape index: {}]
  %s3 = inlined_call_operand.vmem [shape: f32[16,8], index: 3, kind: output, shape index: {}]
  %s4 = sld [smem:[#allocation0]]
  $region42: #{tpu_custom_call.1} parent=0
    _
  %s6 = ssub.s32 1, %s4
  %s7 = scalar_select 0, %s6, %s4
  $region1: #{tpu_custom_call.1} parent=0
    #allocation3 [shape = 'u8[8192]{0}', space=vmem, size = 0x2000, scoped, tag = 'input window, operand 0, single buffered']
    #allocation4 [shape = 's32[1]{0}', space=sflag, size = 0x4, scoped, tag = 'scoped memory for tpu_custom_call.1']
    #allocation5 [shape = 'u8[8192]{0}', space=vmem, size = 0x2000, scoped, tag = 'input window, operand 1, single buffered']
    #allocation6 [shape = 's32[1]{0}', space=sflag, size = 0x4, scoped, tag = 'scoped memory for tpu_custom_call.1']
    #allocation7 [shape = 'u8[4096]{0}', space=vmem, size = 0x1000, scoped, tag = 'input window, operand 2, single buffered']
    %8 = vsyncpa [#allocation4], 0
    %9 = vsyncpa [#allocation6], 0
    // Predicated region
    $region2: #{tpu_custom_call.1} parent=1 // pred_check
      _
    $region3: #{tpu_custom_call.1} parent=1 // pred_check_branch
      %11 = sbr.rel (0) target = $region5
    $region4: #{tpu_custom_call.1} parent=1 // pred_region
      %13 = vsyncadd [#allocation4], 0
      %s14 = sshll.u32 %s0, 4
      %s15 = int_to_ptr.hbm [resolvable:$true] %s14
      %s16 = sshll.u32 [#allocation3], 4
      %s17 = int_to_ptr.vmem [resolvable:$true] %s16
      %22 = dma.hbm_to_vmem [thread:$0]  %s15, 256, %s17, [#allocation4], 128, 128, 8
    $region5: #{tpu_custom_call.1} parent=1 // pred_fallthru
      _
    // Predicated region
    $region6: #{tpu_custom_call.1} parent=1 // pred_check
      _
    $region7: #{tpu_custom_call.1} parent=1 // pred_check_branch
      %24 = sbr.rel (0) target = $region9
    $region8: #{tpu_custom_call.1} parent=1 // pred_region
      %26 = vsyncadd [#allocation6], 0
      %s27 = sshll.u32 %s1, 4
      %s28 = int_to_ptr.hbm [resolvable:$true] %s27
      %s29 = sshll.u32 [#allocation5], 4
      %s30 = int_to_ptr.vmem [resolvable:$true] %s29
      %35 = dma.hbm_to_vmem [thread:$0]  %s28, 256, %s30, [#allocation6], 128, 128, 8
    $region9: #{tpu_custom_call.1} parent=1 // pred_fallthru
      _
    // Predicated region
    $region10: #{tpu_custom_call.1} parent=1 // pred_check
      _
    $region11: #{tpu_custom_call.1} parent=1 // pred_check_branch
      %37 = sbr.rel (0) target = $region13
    $region12: #{tpu_custom_call.1} parent=1 // pred_region
      %39 = vsyncadd [#allocation6], 0
      %s41 = sshll.u32 %s2, 4
      %s42 = int_to_ptr.hbm [resolvable:$true] %s41
      %s43 = sshll.u32 [#allocation7], 4
      %s44 = int_to_ptr.vmem [resolvable:$true] %s43
      %46 = dma.hbm_to_vmem [thread:$0]  %s42, 128, %s44, [#allocation6]
    $region13: #{tpu_custom_call.1} parent=1 // pred_fallthru
      _
    // Predicated region
    $region14: #{tpu_custom_call.1} parent=1 // pred_check
      _
    $region15: #{tpu_custom_call.1} parent=1 // pred_check_branch
      %48 = sbr.rel (0) target = $region17
    $region16: #{tpu_custom_call.1} parent=1 // pred_region
      %50 = dma.done [#allocation4], 256
    $region17: #{tpu_custom_call.1} parent=1 // pred_fallthru
      _
    // Predicated region
    $region18: #{tpu_custom_call.1} parent=1 // pred_check
      _
    $region19: #{tpu_custom_call.1} parent=1 // pred_check_branch
      %52 = sbr.rel (0) target = $region21
    $region20: #{tpu_custom_call.1} parent=1 // pred_region
      %54 = dma.done [#allocation6], 256
    $region21: #{tpu_custom_call.1} parent=1 // pred_fallthru
      _
    // Predicated region
    $region22: #{tpu_custom_call.1} parent=1 // pred_check
      _
    $region23: #{tpu_custom_call.1} parent=1 // pred_check_branch
      %56 = sbr.rel (0) target = $region25
    $region24: #{tpu_custom_call.1} parent=1 // pred_region
      %58 = dma.done [#allocation6], 128
    $region25: #{tpu_custom_call.1} parent=1 // pred_fallthru
      _
    %p59 = scmp.eq.s32.totalorder 0, 0
    // Predicated region
    $region26: #{tpu_custom_call.1} parent=1 // pred_check
      %p60 = pneg %p59
    $region27: #{tpu_custom_call.1} parent=1 // pred_check_branch
      %62 = sbr.rel (%p60) target = $region29
    $region28: #{tpu_custom_call.1} parent=1 // pred_region
      %vm63 = vcmask 130048
      %64 = vst.msk [vmem:[#allocation2] sm:$0xff] %vm63, 0.0
      %65 = vst.msk [vmem:[#allocation2 + $0x8] sm:$0xff] %vm63, 0.0
    $region29: #{tpu_custom_call.1} parent=1 // pred_fallthru
      _
    %v66 = vld [vmem:[#allocation3] sm:$0xff]
    %v67 = vld [vmem:[#allocation3 + $0x8] sm:$0xff]
    %v68 = vld [vmem:[#allocation5] sm:$0xff]
    %v69 = vld [vmem:[#allocation5 + $0x8] sm:$0xff]
    %v70 = vld [vmem:[#allocation2] sm:$0xff]
    %v71 = vld [vmem:[#allocation2 + $0x8] sm:$0xff]
    %vm72 = vcmask 261120
    %v74 = vsel %vm72, %v66, 0
    %v77 = vsel %vm72, %v67, 0
    %v80 = vsel %vm72, %v68, 0
    %v83 = vsel %vm72, %v69, 0
    %85 = vmatpush.xpose.msra.mxu0 0.0
    %86 = vmatpush.xpose.msra.mxu0 0.0
    %87 = vmatpush.xpose.msra.mxu0 0.0
    %88 = vmatpush.xpose.msra.mxu0 0.0
    %89 = vmatpush.xpose.msra.mxu0 0.0
    %90 = vmatpush.xpose.msra.mxu0 0.0
    %91 = vmatpush.xpose.msra.mxu0 0.0
    %92 = vmatpush.xpose.msra.mxu0 0.0
    %93 = vmatpush.xpose.msra.mxu0 0.0
    %94 = vmatpush.xpose.msra.mxu0 0.0
    %95 = vmatpush.xpose.msra.mxu0 0.0
    %96 = vmatpush.xpose.msra.mxu0 0.0
    %97 = vmatpush.xpose.msra.mxu0 0.0
    %98 = vmatpush.xpose.msra.mxu0 0.0
    %99 = vmatpush.xpose.msra.mxu0 %v83
    %100 = vmatpush.xpose.msra.mxu0 %v80
    %101 = vmatmul.f32.gmra.mxu0 %v74
    %v102 = vpop.f32.mrf.mxu0
    %v103 = vadd.f32 0.0, %v102
    %104 = vmatmul.f32.gmra.mxu0 %v77
    %v105 = vpop.f32.mrf.mxu0
    %v106 = vadd.f32 0.0, %v105
    %107 = vdwg.mxu0
    %v108 = vadd.f32 %v70, %v103
    %v109 = vadd.f32 %v71, %v106
    %vm110 = vcmask 130048
    %111 = vst.msk [vmem:[#allocation2] sm:$0xff] %vm110, %v108
    %112 = vst.msk [vmem:[#allocation2 + $0x8] sm:$0xff] %vm110, %v109
    // Predicated region
    $region30: #{tpu_custom_call.1} parent=1 // pred_check
      %p113 = pneg %p59
    $region31: #{tpu_custom_call.1} parent=1 // pred_check_branch
      %115 = sbr.rel (%p113) target = $region33
    $region32: #{tpu_custom_call.1} parent=1 // pred_region
      %v116 = vld [vmem:[#allocation2] sm:$0xff]
      %v117 = vld [vmem:[#allocation2 + $0x8] sm:$0xff]
      %v118 = vld [vmem:[#allocation7] sm:$0xff]
      %v120 = vsel %vm110, %v116, 0
      %v123 = vsel %vm110, %v117, 0
      %v126 = vsel %vm110, %v118, 0
      %128 = vmatpush.xpose.msra.mxu0 0.0
      %129 = vmatpush.xpose.msra.mxu0 0.0
      %130 = vmatpush.xpose.msra.mxu0 0.0
      %131 = vmatpush.xpose.msra.mxu0 0.0
      %132 = vmatpush.xpose.msra.mxu0 0.0
      %133 = vmatpush.xpose.msra.mxu0 0.0
      %134 = vmatpush.xpose.msra.mxu0 0.0
      %135 = vmatpush.xpose.msra.mxu0 0.0
      %136 = vmatpush.xpose.msra.mxu0 0.0
      %137 = vmatpush.xpose.msra.mxu0 0.0
      %138 = vmatpush.xpose.msra.mxu0 0.0
      %139 = vmatpush.xpose.msra.mxu0 0.0
      %140 = vmatpush.xpose.msra.mxu0 0.0
      %141 = vmatpush.xpose.msra.mxu0 0.0
      %142 = vmatpush.xpose.msra.mxu0 0.0
      %143 = vmatpush.xpose.msra.mxu0 %v126
      %144 = vmatmul.f32.gmra.mxu0 %v120
      %v145 = vpop.f32.mrf.mxu0
      %v146 = vadd.f32 0.0, %v145
      %147 = vmatmul.f32.gmra.mxu0 %v123
      %v148 = vpop.f32.mrf.mxu0
      %v149 = vadd.f32 0.0, %v148
      %150 = vdwg.mxu0
      %vm151 = vcmask 64512
      %152 = vst.msk [vmem:[%s3] sm:$0xff] %vm151, %v146
      %153 = vst.msk [vmem:[%s3 + $0x8] sm:$0xff] %vm151, %v149
    $region33: #{tpu_custom_call.1} parent=1 // pred_fallthru
      _
    // Predicated region
    $region34: #{tpu_custom_call.1} parent=1 // pred_check
      _
    $region35: #{tpu_custom_call.1} parent=1 // pred_check_branch
      %155 = sbr.rel (0) target = $region37
    $region36: #{tpu_custom_call.1} parent=1 // pred_region
      _
    $region37: #{tpu_custom_call.1} parent=1 // pred_fallthru
      _
    // Predicated region
    $region38: #{tpu_custom_call.1} parent=1 // pred_check
      _
    $region39: #{tpu_custom_call.1} parent=1 // pred_check_branch
      %157 = sbr.rel (0) target = $region41
    $region40: #{tpu_custom_call.1} parent=1 // pred_region
      _
    $region41: #{tpu_custom_call.1} parent=1 // pred_fallthru
      _
    %158 = vsyncpa [#allocation4], 1
    %159 = vsyncpa [#allocation6], 1

// kernel: tpu_custom_call.1
$region0: #{tpu_custom_call.1}
  #allocation0 [shape = 'u32[]', space=smem, size = 0x4, offset = 0x4, fixed_abs, tag = 'smem constant byte address 0x4 - core index']
  #allocation1 [shape = 'u32[72,128]{1,0:T(1,128)}', space=vmem, size = 0x9000, scoped, tag = 'internal scratch']
  #allocation2 [shape = 'f32[16,16]{1,0:T(8,128)}', space=vmem, size = 0x2000, scoped, tag = 'scratch operand']
  %s0 = inlined_call_operand.hbm [shape: f32[16,32], index: 0, kind: input, shape index: {}]
  %s1 = inlined_call_operand.hbm [shape: f32[16,32], index: 1, kind: input, shape index: {}]
  %s2 = inlined_call_operand.hbm [shape: f32[8,16], index: 2, kind: input, shape index: {}]
  %s3 = inlined_call_operand.vmem [shape: f32[16,8], index: 3, kind: output, shape index: {}]
  %s4 = sld [smem:[#allocation0]]
  $region42: #{tpu_custom_call.1} parent=0
    _
  %s6 = ssub.s32 1, %s4
  %s7 = scalar_select 0, %s6, %s4
  $region1: #{tpu_custom_call.1} parent=0
    #allocation3 [shape = 'u8[8192]{0}', space=vmem, size = 0x2000, scoped, tag = 'input window, operand 0, single buffered']
    #allocation4 [shape = 's32[1]{0}', space=sflag, size = 0x4, scoped, tag = 'scoped memory for tpu_custom_call.1']
    #allocation5 [shape = 'u8[8192]{0}', space=vmem, size = 0x2000, scoped, tag = 'input window, operand 1, single buffered']
    #allocation6 [shape = 's32[1]{0}', space=sflag, size = 0x4, scoped, tag = 'scoped memory for tpu_custom_call.1']
    #allocation7 [shape = 'u8[4096]{0}', space=vmem, size = 0x1000, scoped, tag = 'input window, operand 2, single buffered']
    %8 = vsyncpa [#allocation4], 0
    %9 = vsyncpa [#allocation6], 0
    // Predicated region
    $region2: #{tpu_custom_call.1} parent=1 // pred_check
      _
    $region3: #{tpu_custom_call.1} parent=1 // pred_check_branch
      %11 = sbr.rel (0) target = $region5
    $region4: #{tpu_custom_call.1} parent=1 // pred_region
      %13 = vsyncadd [#allocation4], 0
      %s14 = sshll.u32 %s0, 4
      %s15 = int_to_ptr.hbm [resolvable:$true] %s14
      %s16 = sshll.u32 [#allocation3], 4
      %s17 = int_to_ptr.vmem [resolvable:$true] %s16
      %22 = dma.hbm_to_vmem [thread:$0]  %s15, 256, %s17, [#allocation4], 128, 128, 8
    $region5: #{tpu_custom_call.1} parent=1 // pred_fallthru
      _
    // Predicated region
    $region6: #{tpu_custom_call.1} parent=1 // pred_check
      _
    $region7: #{tpu_custom_call.1} parent=1 // pred_check_branch
      %24 = sbr.rel (0) target = $region9
    $region8: #{tpu_custom_call.1} parent=1 // pred_region
      %26 = vsyncadd [#allocation6], 0
      %s27 = sshll.u32 %s1, 4
      %s28 = int_to_ptr.hbm [resolvable:$true] %s27
      %s29 = sshll.u32 [#allocation5], 4
      %s30 = int_to_ptr.vmem [resolvable:$true] %s29
      %35 = dma.hbm_to_vmem [thread:$0]  %s28, 256, %s30, [#allocation6], 128, 128, 8
    $region9: #{tpu_custom_call.1} parent=1 // pred_fallthru
      _
    // Predicated region
    $region10: #{tpu_custom_call.1} parent=1 // pred_check
      _
    $region11: #{tpu_custom_call.1} parent=1 // pred_check_branch
      %37 = sbr.rel (0) target = $region13
    $region12: #{tpu_custom_call.1} parent=1 // pred_region
      %39 = vsyncadd [#allocation6], 0
      %s41 = sshll.u32 %s2, 4
      %s42 = int_to_ptr.hbm [resolvable:$true] %s41
      %s43 = sshll.u32 [#allocation7], 4
      %s44 = int_to_ptr.vmem [resolvable:$true] %s43
      %46 = dma.hbm_to_vmem [thread:$0]  %s42, 128, %s44, [#allocation6]
    $region13: #{tpu_custom_call.1} parent=1 // pred_fallthru
      _
    // Predicated region
    $region14: #{tpu_custom_call.1} parent=1 // pred_check
      _
    $region15: #{tpu_custom_call.1} parent=1 // pred_check_branch
      %48 = sbr.rel (0) target = $region17
    $region16: #{tpu_custom_call.1} parent=1 // pred_region
      %50 = dma.done [#allocation4], 256
    $region17: #{tpu_custom_call.1} parent=1 // pred_fallthru
      _
    // Predicated region
    $region18: #{tpu_custom_call.1} parent=1 // pred_check
      _
    $region19: #{tpu_custom_call.1} parent=1 // pred_check_branch
      %52 = sbr.rel (0) target = $region21
    $region20: #{tpu_custom_call.1} parent=1 // pred_region
      %54 = dma.done [#allocation6], 256
    $region21: #{tpu_custom_call.1} parent=1 // pred_fallthru
      _
    // Predicated region
    $region22: #{tpu_custom_call.1} parent=1 // pred_check
      _
    $region23: #{tpu_custom_call.1} parent=1 // pred_check_branch
      %56 = sbr.rel (0) target = $region25
    $region24: #{tpu_custom_call.1} parent=1 // pred_region
      %58 = dma.done [#allocation6], 128
    $region25: #{tpu_custom_call.1} parent=1 // pred_fallthru
      _
    %p59 = scmp.eq.s32.totalorder 0, 0
    // Predicated region
    $region26: #{tpu_custom_call.1} parent=1 // pred_check
      %p60 = pneg %p59
    $region27: #{tpu_custom_call.1} parent=1 // pred_check_branch
      %62 = sbr.rel (%p60) target = $region29
    $region28: #{tpu_custom_call.1} parent=1 // pred_region
      %vm63 = vcmask 130048
      %64 = vst.msk [vmem:[#allocation2] sm:$0xff] %vm63, 0.0
      %65 = vst.msk [vmem:[#allocation2 + $0x8] sm:$0xff] %vm63, 0.0
    $region29: #{tpu_custom_call.1} parent=1 // pred_fallthru
      _
    %v66 = vld [vmem:[#allocation3] sm:$0xff]
    %v67 = vld [vmem:[#allocation3 + $0x8] sm:$0xff]
    %v68 = vld [vmem:[#allocation5] sm:$0xff]
    %v69 = vld [vmem:[#allocation5 + $0x8] sm:$0xff]
    %v70 = vld [vmem:[#allocation2] sm:$0xff]
    %v71 = vld [vmem:[#allocation2 + $0x8] sm:$0xff]
    %vm72 = vcmask 261120
    %v74 = vsel %vm72, %v66, 0
    %v77 = vsel %vm72, %v67, 0
    %v80 = vsel %vm72, %v68, 0
    %v83 = vsel %vm72, %v69, 0
    %85 = vmatpush.xpose.msra.mxu0 0.0
    %86 = vmatpush.xpose.msra.mxu0 0.0
    %87 = vmatpush.xpose.msra.mxu0 0.0
    %88 = vmatpush.xpose.msra.mxu0 0.0
    %89 = vmatpush.xpose.msra.mxu0 0.0
    %90 = vmatpush.xpose.msra.mxu0 0.0
    %91 = vmatpush.xpose.msra.mxu0 0.0
    %92 = vmatpush.xpose.msra.mxu0 0.0
    %93 = vmatpush.xpose.msra.mxu0 0.0
    %94 = vmatpush.xpose.msra.mxu0 0.0
    %95 = vmatpush.xpose.msra.mxu0 0.0
    %96 = vmatpush.xpose.msra.mxu0 0.0
    %97 = vmatpush.xpose.msra.mxu0 0.0
    %98 = vmatpush.xpose.msra.mxu0 0.0
    %99 = vmatpush.xpose.msra.mxu0 %v83
    %100 = vmatpush.xpose.msra.mxu0 %v80
    %101 = vmatmul.f32.gmra.mxu0 %v74
    %v102 = vpop.f32.mrf.mxu0
    %v103 = vadd.f32 0.0, %v102
    %104 = vmatmul.f32.gmra.mxu0 %v77
    %v105 = vpop.f32.mrf.mxu0
    %v106 = vadd.f32 0.0, %v105
    %107 = vdwg.mxu0
    %v108 = vadd.f32 %v70, %v103
    %v109 = vadd.f32 %v71, %v106
    %vm110 = vcmask 130048
    %111 = vst.msk [vmem:[#allocation2] sm:$0xff] %vm110, %v108
    %112 = vst.msk [vmem:[#allocation2 + $0x8] sm:$0xff] %vm110, %v109
    // Predicated region
    $region30: #{tpu_custom_call.1} parent=1 // pred_check
      %p113 = pneg %p59
    $region31: #{tpu_custom_call.1} parent=1 // pred_check_branch
      %115 = sbr.rel (%p113) target = $region33
    $region32: #{tpu_custom_call.1} parent=1 // pred_region
      %v116 = vld [vmem:[#allocation2] sm:$0xff]
      %v117 = vld [vmem:[#allocation2 + $0x8] sm:$0xff]
      %v118 = vld [vmem:[#allocation7] sm:$0xff]
      %v120 = vsel %vm110, %v116, 0
      %v123 = vsel %vm110, %v117, 0
      %v126 = vsel %vm110, %v118, 0
      %128 = vmatpush.xpose.msra.mxu0 0.0
      %129 = vmatpush.xpose.msra.mxu0 0.0
      %130 = vmatpush.xpose.msra.mxu0 0.0
      %131 = vmatpush.xpose.msra.mxu0 0.0
      %132 = vmatpush.xpose.msra.mxu0 0.0
      %133 = vmatpush.xpose.msra.mxu0 0.0
      %134 = vmatpush.xpose.msra.mxu0 0.0
      %135 = vmatpush.xpose.msra.mxu0 0.0
      %136 = vmatpush.xpose.msra.mxu0 0.0
      %137 = vmatpush.xpose.msra.mxu0 0.0
      %138 = vmatpush.xpose.msra.mxu0 0.0
      %139 = vmatpush.xpose.msra.mxu0 0.0
      %140 = vmatpush.xpose.msra.mxu0 0.0
      %141 = vmatpush.xpose.msra.mxu0 0.0
      %142 = vmatpush.xpose.msra.mxu0 0.0
      %143 = vmatpush.xpose.msra.mxu0 %v126
      %144 = vmatmul.f32.gmra.mxu0 %v120
      %v145 = vpop.f32.mrf.mxu0
      %v146 = vadd.f32 0.0, %v145
      %147 = vmatmul.f32.gmra.mxu0 %v123
      %v148 = vpop.f32.mrf.mxu0
      %v149 = vadd.f32 0.0, %v148
      %150 = vdwg.mxu0
      %vm151 = vcmask 64512
      %152 = vst.msk [vmem:[%s3] sm:$0xff] %vm151, %v146
      %153 = vst.msk [vmem:[%s3 + $0x8] sm:$0xff] %vm151, %v149
    $region33: #{tpu_custom_call.1} parent=1 // pred_fallthru
      _
    // Predicated region
    $region34: #{tpu_custom_call.1} parent=1 // pred_check
      _
    $region35: #{tpu_custom_call.1} parent=1 // pred_check_branch
      %155 = sbr.rel (0) target = $region37
    $region36: #{tpu_custom_call.1} parent=1 // pred_region
      _
    $region37: #{tpu_custom_call.1} parent=1 // pred_fallthru
      _
    // Predicated region
    $region38: #{tpu_custom_call.1} parent=1 // pred_check
      _
    $region39: #{tpu_custom_call.1} parent=1 // pred_check_branch
      %157 = sbr.rel (0) target = $region41
    $region40: #{tpu_custom_call.1} parent=1 // pred_region
      _
    $region41: #{tpu_custom_call.1} parent=1 // pred_fallthru
      _
    %158 = vsyncpa [#allocation4], 1
    %159 = vsyncpa [#allocation6], 1

</llo_original>
